<compile_context>
chip_gen: v6e
topology: v6e:2x2x1
jax: 0.10.0
libtpu: 0.0.40
codegen_flags: <defaults>
</compile_context>

<pallas_src>
import jax
import jax.numpy as jnp
from jax.experimental import pallas as pl
from jax.experimental.pallas import tpu as pltpu

STATNUM = 32       # statnum  (input feature count)
MUSCLENUM = 8      # musclenum (output pairs)
LN_EPS = 1e-5      # PyTorch nn.LayerNorm default eps
MAX_TILE_B = 1024  # rows per grid step (multiple of 8 sublanes)


def _ln_relu(h, gamma, beta):
    d = h.shape[-1]
    inv_d = 1.0 / float(d)
    # Single-pass variance: the two row reductions are independent so the XLU
    # reductions can issue back-to-back (shorter critical path than
    # sum(h) -> mu -> hc -> sum(hc*hc)).
    s1 = jnp.sum(h, axis=-1, keepdims=True)
    s2 = jnp.sum(h * h, axis=-1, keepdims=True)
    mu = s1 * inv_d
    var = jnp.maximum(s2 * inv_d - mu * mu, 0.0)
    hn = (h - mu) * jax.lax.rsqrt(var + LN_EPS)
    return jnp.maximum(hn * gamma + beta, 0.0)


def mlp_policy_kernel(x_ref,
                      w1_ref, b1_ref, g1_ref, bt1_ref,
                      w2_ref, b2_ref, g2_ref, bt2_ref,
                      w3_ref, b3_ref, g3_ref, bt3_ref,
                      w4d_ref, b4d_ref,
                      o_ref):
    x = x_ref[...]

    h = jnp.dot(x, w1_ref[...], preferred_element_type=jnp.float32) + b1_ref[...]
    h = _ln_relu(h, g1_ref[...], bt1_ref[...])

    h = jnp.dot(h, w2_ref[...], preferred_element_type=jnp.float32) + b2_ref[...]
    h = _ln_relu(h, g2_ref[...], bt2_ref[...])

    h = jnp.dot(h, w3_ref[...], preferred_element_type=jnp.float32) + b3_ref[...]
    h = _ln_relu(h, g3_ref[...], bt3_ref[...])

    # w4d / b4d are the pre-computed pair differences, so d[:, k] is the logit
    # of column k minus the logit of its partner (k XOR 1) -- already in the
    # original interleaved column order.  Pairwise softmax == sigmoid(d).
    d = jnp.dot(h, w4d_ref[...], preferred_element_type=jnp.float32) + b4d_ref[...]

    # Numerically stable sigmoid: one exp (EUP) + approx reciprocal (EUP) with
    # a Newton step to recover full f32 accuracy.
    e = jnp.exp(-jnp.abs(d))                       # in (0, 1], never overflows
    denom = 1.0 + e
    inv = pl.reciprocal(denom, approx=True)
    inv = inv * (2.0 - denom * inv)                # one Newton step
    o_ref[...] = jnp.where(d >= 0.0, inv, e * inv)


def init_params(key, statnum=STATNUM, musclenum=MUSCLENUM):
    """Deterministic init mimicking nn.Linear defaults (uniform +-1/sqrt(fan_in))."""
    dims = [(statnum, 128), (128, 128), (128, 64), (64, musclenum * 2)]
    params = {}
    keys = jax.random.split(key, 2 * len(dims))
    for i, (fin, fout) in enumerate(dims):
        bound = 1.0 / jnp.sqrt(float(fin))
        params[f"w{i+1}"] = jax.random.uniform(
            keys[2 * i], (fin, fout), jnp.float32, -bound, bound)
        params[f"b{i+1}"] = jax.random.uniform(
            keys[2 * i + 1], (1, fout), jnp.float32, -bound, bound)
    # LayerNorm params: gamma=1, beta=0 (PyTorch default)
    for i, d in enumerate([128, 128, 64]):
        params[f"g{i+1}"] = jnp.ones((1, d), jnp.float32)
        params[f"bt{i+1}"] = jnp.zeros((1, d), jnp.float32)
    return params


def prepare_params(params):
    """Precompute (once) the pair-difference final layer used by the kernel.

    Column k's partner is k XOR 1 (the other action of the same muscle), so
    logit_k - logit_partner(k) = h @ (w4[:,k] - w4[:,partner]) + (b4 diff).
    """
    out_w = params["w4"].shape[1]
    perm = jnp.arange(out_w) ^ 1          # swap within each (even, odd) pair
    prepared = dict(params)
    prepared["w4d"] = params["w4"] - params["w4"][:, perm]
    prepared["b4d"] = params["b4"] - params["b4"][:, perm]
    return prepared


def model_forward(params, x):
    """Pallas-backed forward; returns probs of shape (..., musclenum, 2).

    `params` must come from prepare_params() (contains w4d/b4d).
    """
    need_squeeze = x.ndim == 1
    if need_squeeze:
        x = x[None, :]
    x = x.astype(jnp.float32)

    b, statnum = x.shape
    out_w = params["w4d"].shape[1]
    m = out_w // 2

    # Batch-tile selection:
    #  * multiple of 8 sublanes, capped at MAX_TILE_B
    #  * aim for >= 2 grid steps so v7x's two TensorCores both get work
    # Tiny batches (< 8 rows) get a negligible pad to one 8-row tile; otherwise
    # no padding -- the ragged tail is a partial last block (OOB rows are
    # garbage in, dropped on the masked writeback).
    rows = b
    if b < 8:
        x = jnp.pad(x, ((0, 8 - b), (0, 0)))
        rows = 8
    half = (rows + 1) // 2
    tile_b = min(MAX_TILE_B, max(8, ((half + 7) // 8) * 8))
    grid = (pl.cdiv(rows, tile_b),)

    weights = (params["w1"], params["b1"], params["g1"], params["bt1"],
               params["w2"], params["b2"], params["g2"], params["bt2"],
               params["w3"], params["b3"], params["g3"], params["bt3"],
               params["w4d"], params["b4d"])

    x_spec = pl.BlockSpec((tile_b, statnum), lambda i: (i, 0))
    out_spec = pl.BlockSpec((tile_b, out_w), lambda i: (i, 0))
    # Weights/LN params: same block index every grid step -> stay VMEM-resident.
    w_specs = [pl.BlockSpec(w.shape, lambda i: (0, 0)) for w in weights]

    probs_flat = pl.pallas_call(
        mlp_policy_kernel,
        out_shape=jax.ShapeDtypeStruct((rows, out_w), jnp.float32),
        grid=grid,
        in_specs=[x_spec] + w_specs,
        out_specs=out_spec,
        compiler_params=pltpu.CompilerParams(
            dimension_semantics=("parallel",),
            vmem_limit_bytes=32 * 1024 * 1024),
    )(x, *weights)

    if rows != b:
        probs_flat = probs_flat[:b]
    # Interleaved columns -> (b, m, 2) is a trivial (bitcast) reshape: no copy.
    probs = probs_flat.reshape(b, m, 2)
    if need_squeeze:
        probs = probs[0]
    return probs


def model_forward_ref(params, x):
    """Plain-JAX reference matching the PyTorch forward."""
    if x.ndim == 1:
        x = x[None, :]
        squeeze = True
    else:
        squeeze = False
    h = x.astype(jnp.float32)
    for i in (1, 2, 3):
        h = h @ params[f"w{i}"] + params[f"b{i}"]
        mu = h.mean(-1, keepdims=True)
        var = ((h - mu) ** 2).mean(-1, keepdims=True)
        h = (h - mu) / jnp.sqrt(var + LN_EPS)
        h = jnp.maximum(h * params[f"g{i}"] + params[f"bt{i}"], 0.0)
    logits = h @ params["w4"] + params["b4"]
    b = logits.shape[0]
    m = logits.shape[1] // 2
    probs = jax.nn.softmax(logits.reshape(b, m, 2), axis=2)
    return probs[0] if squeeze else probs


if __name__ == "__main__":
    key = jax.random.PRNGKey(0)
    pkey, xkey, xkey2 = jax.random.split(key, 3)
    params = init_params(pkey)
    prepared = prepare_params(params)

    # Small-batch check (batch=2, padded to one 8-row tile inside the wrapper).
    batch = 2
    x = jax.random.normal(xkey, (batch, STATNUM), jnp.float32)
    probs = jax.block_until_ready(model_forward(prepared, x))
    ref = model_forward_ref(params, x)
    assert probs.shape == (batch, MUSCLENUM, 2), probs.shape
    assert jnp.allclose(probs, ref, atol=1e-5, rtol=1e-5), (
        float(jnp.max(jnp.abs(probs - ref))))
    assert jnp.allclose(probs.sum(-1), 1.0, atol=1e-5)

    # Multi-tile check: exercises the batch grid and the partial last block
    # (1300 rows -> 2 grid steps of 656, last block only 644 rows valid).
    batch2 = 1300
    x2 = jax.random.normal(xkey2, (batch2, STATNUM), jnp.float32)
    probs2 = jax.block_until_ready(model_forward(prepared, x2))
    ref2 = model_forward_ref(params, x2)
    assert probs2.shape == (batch2, MUSCLENUM, 2), probs2.shape
    assert jnp.allclose(probs2, ref2, atol=1e-5, rtol=1e-5), (
        float(jnp.max(jnp.abs(probs2 - ref2))))
    assert jnp.allclose(probs2.sum(-1), 1.0, atol=1e-5)

    # 1-D input path (PyTorch's need_squeeze branch).
    probs1d = jax.block_until_ready(model_forward(prepared, x[0]))
    assert probs1d.shape == (MUSCLENUM, 2)
    assert jnp.allclose(probs1d, ref[0], atol=1e-5, rtol=1e-5)

    print("KERNEL_OK")
</pallas_src>

<mosaic_0001>
module attributes {stable_mosaic.version = 11 : i64} {
  func.func @mlp_policy_kernel(%arg0: i32, %arg1: memref<8x32xf32, #tpu.memory_space<vmem>>, %arg2: memref<32x128xf32, #tpu.memory_space<vmem>>, %arg3: memref<1x128xf32, #tpu.memory_space<vmem>>, %arg4: memref<1x128xf32, #tpu.memory_space<vmem>>, %arg5: memref<1x128xf32, #tpu.memory_space<vmem>>, %arg6: memref<128x128xf32, #tpu.memory_space<vmem>>, %arg7: memref<1x128xf32, #tpu.memory_space<vmem>>, %arg8: memref<1x128xf32, #tpu.memory_space<vmem>>, %arg9: memref<1x128xf32, #tpu.memory_space<vmem>>, %arg10: memref<128x64xf32, #tpu.memory_space<vmem>>, %arg11: memref<1x64xf32, #tpu.memory_space<vmem>>, %arg12: memref<1x64xf32, #tpu.memory_space<vmem>>, %arg13: memref<1x64xf32, #tpu.memory_space<vmem>>, %arg14: memref<64x16xf32, #tpu.memory_space<vmem>>, %arg15: memref<1x16xf32, #tpu.memory_space<vmem>>, %arg16: memref<8x16xf32, #tpu.memory_space<vmem>>) attributes {dimension_semantics = [#tpu.dimension_semantics<parallel>], iteration_bounds = array<i64: 1>, scalar_prefetch = 0 : i64, scratch_operands = 0 : i64, tpu.core_type = #tpu.core_type<tc>, window_params = [{transform_indices = @transform_0, window_bounds = array<i64: 8, 32>}, {pipeline_mode = #tpu.pipeline_mode<synchronous>, transform_indices = @transform_1, window_bounds = array<i64: 32, 128>}, {pipeline_mode = #tpu.pipeline_mode<synchronous>, transform_indices = @transform_2, window_bounds = array<i64: 1, 128>}, {pipeline_mode = #tpu.pipeline_mode<synchronous>, transform_indices = @transform_3, window_bounds = array<i64: 1, 128>}, {pipeline_mode = #tpu.pipeline_mode<synchronous>, transform_indices = @transform_4, window_bounds = array<i64: 1, 128>}, {pipeline_mode = #tpu.pipeline_mode<synchronous>, transform_indices = @transform_5, window_bounds = array<i64: 128, 128>}, {pipeline_mode = #tpu.pipeline_mode<synchronous>, transform_indices = @transform_6, window_bounds = array<i64: 1, 128>}, {pipeline_mode = #tpu.pipeline_mode<synchronous>, transform_indices = @transform_7, window_bounds = array<i64: 1, 128>}, {pipeline_mode = #tpu.pipeline_mode<synchronous>, transform_indices = @transform_8, window_bounds = array<i64: 1, 128>}, {pipeline_mode = #tpu.pipeline_mode<synchronous>, transform_indices = @transform_9, window_bounds = array<i64: 128, 64>}, {pipeline_mode = #tpu.pipeline_mode<synchronous>, transform_indices = @transform_10, window_bounds = array<i64: 1, 64>}, {pipeline_mode = #tpu.pipeline_mode<synchronous>, transform_indices = @transform_11, window_bounds = array<i64: 1, 64>}, {pipeline_mode = #tpu.pipeline_mode<synchronous>, transform_indices = @transform_12, window_bounds = array<i64: 1, 64>}, {pipeline_mode = #tpu.pipeline_mode<synchronous>, transform_indices = @transform_13, window_bounds = array<i64: 64, 16>}, {pipeline_mode = #tpu.pipeline_mode<synchronous>, transform_indices = @transform_14, window_bounds = array<i64: 1, 16>}, {transform_indices = @transform_15, window_bounds = array<i64: 8, 16>}]} {
    %c0 = arith.constant 0 : index
    %c0_0 = arith.constant 0 : index
    %0 = vector.load %arg1[%c0, %c0_0] : memref<8x32xf32, #tpu.memory_space<vmem>>, vector<8x32xf32>
    %c0_1 = arith.constant 0 : index
    %c0_2 = arith.constant 0 : index
    %1 = vector.load %arg2[%c0_1, %c0_2] : memref<32x128xf32, #tpu.memory_space<vmem>>, vector<32x128xf32>
    %cst = arith.constant dense<0.000000e+00> : vector<8x128xf32>
    %2 = tpu.matmul %0, %1, %cst {dimension_numbers = #tpu.dot_dimension_numbers<[1], [0], [0], [1], [0, 0, 1, 1], [], []>} : vector<8x32xf32>, vector<32x128xf32>, vector<8x128xf32> -> vector<8x128xf32>
    %c0_3 = arith.constant 0 : index
    %c0_4 = arith.constant 0 : index
    %3 = vector.load %arg3[%c0_3, %c0_4] : memref<1x128xf32, #tpu.memory_space<vmem>>, vector<1x128xf32>
    %4 = vector.broadcast %3 : vector<1x128xf32> to vector<8x128xf32>
    %5 = arith.addf %2, %4 : vector<8x128xf32>
    %c0_5 = arith.constant 0 : index
    %c0_6 = arith.constant 0 : index
    %6 = vector.load %arg4[%c0_5, %c0_6] : memref<1x128xf32, #tpu.memory_space<vmem>>, vector<1x128xf32>
    %c0_7 = arith.constant 0 : index
    %c0_8 = arith.constant 0 : index
    %7 = vector.load %arg5[%c0_7, %c0_8] : memref<1x128xf32, #tpu.memory_space<vmem>>, vector<1x128xf32>
    %cst_9 = arith.constant dense<0.000000e+00> : vector<8xf32>
    %8 = vector.multi_reduction <add>, %5, %cst_9 [1] : vector<8x128xf32> to vector<8xf32>
    %9 = vector.shape_cast %8 : vector<8xf32> to vector<8x1xf32>
    %10 = arith.mulf %5, %5 : vector<8x128xf32>
    %cst_10 = arith.constant dense<0.000000e+00> : vector<8xf32>
    %11 = vector.multi_reduction <add>, %10, %cst_10 [1] : vector<8x128xf32> to vector<8xf32>
    %12 = vector.shape_cast %11 : vector<8xf32> to vector<8x1xf32>
    %cst_11 = arith.constant 7.812500e-03 : f32
    %13 = vector.broadcast %cst_11 : f32 to vector<8x1xf32>
    %14 = arith.mulf %9, %13 : vector<8x1xf32>
    %cst_12 = arith.constant 7.812500e-03 : f32
    %15 = vector.broadcast %cst_12 : f32 to vector<8x1xf32>
    %16 = arith.mulf %12, %15 : vector<8x1xf32>
    %17 = arith.mulf %14, %14 : vector<8x1xf32>
    %18 = arith.subf %16, %17 : vector<8x1xf32>
    %cst_13 = arith.constant 0.000000e+00 : f32
    %19 = vector.broadcast %cst_13 : f32 to vector<8x1xf32>
    %20 = arith.maximumf %18, %19 : vector<8x1xf32>
    %21 = vector.broadcast %14 : vector<8x1xf32> to vector<8x128xf32>
    %22 = arith.subf %5, %21 : vector<8x128xf32>
    %cst_14 = arith.constant 9.99999974E-6 : f32
    %23 = vector.broadcast %cst_14 : f32 to vector<8x1xf32>
    %24 = arith.addf %20, %23 : vector<8x1xf32>
    %25 = math.rsqrt %24 : vector<8x1xf32>
    %26 = vector.broadcast %25 : vector<8x1xf32> to vector<8x128xf32>
    %27 = arith.mulf %22, %26 : vector<8x128xf32>
    %28 = vector.broadcast %6 : vector<1x128xf32> to vector<8x128xf32>
    %29 = arith.mulf %27, %28 : vector<8x128xf32>
    %30 = vector.broadcast %7 : vector<1x128xf32> to vector<8x128xf32>
    %31 = arith.addf %29, %30 : vector<8x128xf32>
    %cst_15 = arith.constant 0.000000e+00 : f32
    %32 = vector.broadcast %cst_15 : f32 to vector<8x128xf32>
    %33 = arith.maximumf %31, %32 : vector<8x128xf32>
    %c0_16 = arith.constant 0 : index
    %c0_17 = arith.constant 0 : index
    %34 = vector.load %arg6[%c0_16, %c0_17] : memref<128x128xf32, #tpu.memory_space<vmem>>, vector<128x128xf32>
    %cst_18 = arith.constant dense<0.000000e+00> : vector<8x128xf32>
    %35 = tpu.matmul %33, %34, %cst_18 {dimension_numbers = #tpu.dot_dimension_numbers<[1], [0], [0], [1], [0, 0, 1, 1], [], []>} : vector<8x128xf32>, vector<128x128xf32>, vector<8x128xf32> -> vector<8x128xf32>
    %c0_19 = arith.constant 0 : index
    %c0_20 = arith.constant 0 : index
    %36 = vector.load %arg7[%c0_19, %c0_20] : memref<1x128xf32, #tpu.memory_space<vmem>>, vector<1x128xf32>
    %37 = vector.broadcast %36 : vector<1x128xf32> to vector<8x128xf32>
    %38 = arith.addf %35, %37 : vector<8x128xf32>
    %c0_21 = arith.constant 0 : index
    %c0_22 = arith.constant 0 : index
    %39 = vector.load %arg8[%c0_21, %c0_22] : memref<1x128xf32, #tpu.memory_space<vmem>>, vector<1x128xf32>
    %c0_23 = arith.constant 0 : index
    %c0_24 = arith.constant 0 : index
    %40 = vector.load %arg9[%c0_23, %c0_24] : memref<1x128xf32, #tpu.memory_space<vmem>>, vector<1x128xf32>
    %cst_25 = arith.constant dense<0.000000e+00> : vector<8xf32>
    %41 = vector.multi_reduction <add>, %38, %cst_25 [1] : vector<8x128xf32> to vector<8xf32>
    %42 = vector.shape_cast %41 : vector<8xf32> to vector<8x1xf32>
    %43 = arith.mulf %38, %38 : vector<8x128xf32>
    %cst_26 = arith.constant dense<0.000000e+00> : vector<8xf32>
    %44 = vector.multi_reduction <add>, %43, %cst_26 [1] : vector<8x128xf32> to vector<8xf32>
    %45 = vector.shape_cast %44 : vector<8xf32> to vector<8x1xf32>
    %cst_27 = arith.constant 7.812500e-03 : f32
    %46 = vector.broadcast %cst_27 : f32 to vector<8x1xf32>
    %47 = arith.mulf %42, %46 : vector<8x1xf32>
    %cst_28 = arith.constant 7.812500e-03 : f32
    %48 = vector.broadcast %cst_28 : f32 to vector<8x1xf32>
    %49 = arith.mulf %45, %48 : vector<8x1xf32>
    %50 = arith.mulf %47, %47 : vector<8x1xf32>
    %51 = arith.subf %49, %50 : vector<8x1xf32>
    %cst_29 = arith.constant 0.000000e+00 : f32
    %52 = vector.broadcast %cst_29 : f32 to vector<8x1xf32>
    %53 = arith.maximumf %51, %52 : vector<8x1xf32>
    %54 = vector.broadcast %47 : vector<8x1xf32> to vector<8x128xf32>
    %55 = arith.subf %38, %54 : vector<8x128xf32>
    %cst_30 = arith.constant 9.99999974E-6 : f32
    %56 = vector.broadcast %cst_30 : f32 to vector<8x1xf32>
    %57 = arith.addf %53, %56 : vector<8x1xf32>
    %58 = math.rsqrt %57 : vector<8x1xf32>
    %59 = vector.broadcast %58 : vector<8x1xf32> to vector<8x128xf32>
    %60 = arith.mulf %55, %59 : vector<8x128xf32>
    %61 = vector.broadcast %39 : vector<1x128xf32> to vector<8x128xf32>
    %62 = arith.mulf %60, %61 : vector<8x128xf32>
    %63 = vector.broadcast %40 : vector<1x128xf32> to vector<8x128xf32>
    %64 = arith.addf %62, %63 : vector<8x128xf32>
    %cst_31 = arith.constant 0.000000e+00 : f32
    %65 = vector.broadcast %cst_31 : f32 to vector<8x128xf32>
    %66 = arith.maximumf %64, %65 : vector<8x128xf32>
    %c0_32 = arith.constant 0 : index
    %c0_33 = arith.constant 0 : index
    %67 = vector.load %arg10[%c0_32, %c0_33] : memref<128x64xf32, #tpu.memory_space<vmem>>, vector<128x64xf32>
    %cst_34 = arith.constant dense<0.000000e+00> : vector<8x64xf32>
    %68 = tpu.matmul %66, %67, %cst_34 {dimension_numbers = #tpu.dot_dimension_numbers<[1], [0], [0], [1], [0, 0, 1, 1], [], []>} : vector<8x128xf32>, vector<128x64xf32>, vector<8x64xf32> -> vector<8x64xf32>
    %c0_35 = arith.constant 0 : index
    %c0_36 = arith.constant 0 : index
    %69 = vector.load %arg11[%c0_35, %c0_36] : memref<1x64xf32, #tpu.memory_space<vmem>>, vector<1x64xf32>
    %70 = vector.broadcast %69 : vector<1x64xf32> to vector<8x64xf32>
    %71 = arith.addf %68, %70 : vector<8x64xf32>
    %c0_37 = arith.constant 0 : index
    %c0_38 = arith.constant 0 : index
    %72 = vector.load %arg12[%c0_37, %c0_38] : memref<1x64xf32, #tpu.memory_space<vmem>>, vector<1x64xf32>
    %c0_39 = arith.constant 0 : index
    %c0_40 = arith.constant 0 : index
    %73 = vector.load %arg13[%c0_39, %c0_40] : memref<1x64xf32, #tpu.memory_space<vmem>>, vector<1x64xf32>
    %cst_41 = arith.constant dense<0.000000e+00> : vector<8xf32>
    %74 = vector.multi_reduction <add>, %71, %cst_41 [1] : vector<8x64xf32> to vector<8xf32>
    %75 = vector.shape_cast %74 : vector<8xf32> to vector<8x1xf32>
    %76 = arith.mulf %71, %71 : vector<8x64xf32>
    %cst_42 = arith.constant dense<0.000000e+00> : vector<8xf32>
    %77 = vector.multi_reduction <add>, %76, %cst_42 [1] : vector<8x64xf32> to vector<8xf32>
    %78 = vector.shape_cast %77 : vector<8xf32> to vector<8x1xf32>
    %cst_43 = arith.constant 1.562500e-02 : f32
    %79 = vector.broadcast %cst_43 : f32 to vector<8x1xf32>
    %80 = arith.mulf %75, %79 : vector<8x1xf32>
    %cst_44 = arith.constant 1.562500e-02 : f32
    %81 = vector.broadcast %cst_44 : f32 to vector<8x1xf32>
    %82 = arith.mulf %78, %81 : vector<8x1xf32>
    %83 = arith.mulf %80, %80 : vector<8x1xf32>
    %84 = arith.subf %82, %83 : vector<8x1xf32>
    %cst_45 = arith.constant 0.000000e+00 : f32
    %85 = vector.broadcast %cst_45 : f32 to vector<8x1xf32>
    %86 = arith.maximumf %84, %85 : vector<8x1xf32>
    %87 = vector.broadcast %80 : vector<8x1xf32> to vector<8x64xf32>
    %88 = arith.subf %71, %87 : vector<8x64xf32>
    %cst_46 = arith.constant 9.99999974E-6 : f32
    %89 = vector.broadcast %cst_46 : f32 to vector<8x1xf32>
    %90 = arith.addf %86, %89 : vector<8x1xf32>
    %91 = math.rsqrt %90 : vector<8x1xf32>
    %92 = vector.broadcast %91 : vector<8x1xf32> to vector<8x64xf32>
    %93 = arith.mulf %88, %92 : vector<8x64xf32>
    %94 = vector.broadcast %72 : vector<1x64xf32> to vector<8x64xf32>
    %95 = arith.mulf %93, %94 : vector<8x64xf32>
    %96 = vector.broadcast %73 : vector<1x64xf32> to vector<8x64xf32>
    %97 = arith.addf %95, %96 : vector<8x64xf32>
    %cst_47 = arith.constant 0.000000e+00 : f32
    %98 = vector.broadcast %cst_47 : f32 to vector<8x64xf32>
    %99 = arith.maximumf %97, %98 : vector<8x64xf32>
    %c0_48 = arith.constant 0 : index
    %c0_49 = arith.constant 0 : index
    %100 = vector.load %arg14[%c0_48, %c0_49] : memref<64x16xf32, #tpu.memory_space<vmem>>, vector<64x16xf32>
    %cst_50 = arith.constant dense<0.000000e+00> : vector<8x16xf32>
    %101 = tpu.matmul %99, %100, %cst_50 {dimension_numbers = #tpu.dot_dimension_numbers<[1], [0], [0], [1], [0, 0, 1, 1], [], []>} : vector<8x64xf32>, vector<64x16xf32>, vector<8x16xf32> -> vector<8x16xf32>
    %c0_51 = arith.constant 0 : index
    %c0_52 = arith.constant 0 : index
    %102 = vector.load %arg15[%c0_51, %c0_52] : memref<1x16xf32, #tpu.memory_space<vmem>>, vector<1x16xf32>
    %103 = vector.broadcast %102 : vector<1x16xf32> to vector<8x16xf32>
    %104 = arith.addf %101, %103 : vector<8x16xf32>
    %105 = math.absf %104 : vector<8x16xf32>
    %cst_53 = arith.constant 0.000000e+00 : f32
    %106 = vector.broadcast %cst_53 : f32 to vector<8x16xf32>
    %107 = arith.subf %106, %105 : vector<8x16xf32>
    %108 = math.exp %107 : vector<8x16xf32>
    %cst_54 = arith.constant 1.000000e+00 : f32
    %109 = vector.broadcast %cst_54 : f32 to vector<8x16xf32>
    %110 = arith.addf %109, %108 : vector<8x16xf32>
    %111 = tpu.reciprocal %110 {approx = true} : vector<8x16xf32> -> vector<8x16xf32>
    %112 = arith.mulf %110, %111 : vector<8x16xf32>
    %cst_55 = arith.constant 2.000000e+00 : f32
    %113 = vector.broadcast %cst_55 : f32 to vector<8x16xf32>
    %114 = arith.subf %113, %112 : vector<8x16xf32>
    %115 = arith.mulf %111, %114 : vector<8x16xf32>
    %cst_56 = arith.constant 0.000000e+00 : f32
    %116 = vector.broadcast %cst_56 : f32 to vector<8x16xf32>
    %117 = arith.cmpf oge, %104, %116 : vector<8x16xf32>
    %118 = arith.mulf %108, %115 : vector<8x16xf32>
    %119 = arith.select %117, %115, %118 : vector<8x16xi1>, vector<8x16xf32>
    %c0_57 = arith.constant 0 : index
    %c0_58 = arith.constant 0 : index
    %120 = vector.load %arg16[%c0_57, %c0_58] : memref<8x16xf32, #tpu.memory_space<vmem>>, vector<8x16xf32>
    tpu.vector_store %arg16[%c0_57, %c0_58], %119 {strides = array<i32>} : memref<8x16xf32, #tpu.memory_space<vmem>>, vector<8x16xf32>,
    return
  }
  func.func @transform_0(%arg0: i32) -> (i32, i32) {
    %c0_i32 = arith.constant 0 : i32
    %c0_i32_0 = arith.constant 0 : i32
    return %arg0, %c0_i32 : i32, i32
  }
  func.func @transform_1(%arg0: i32) -> (i32, i32) {
    %c0_i32 = arith.constant 0 : i32
    %c0_i32_0 = arith.constant 0 : i32
    %c0_i32_1 = arith.constant 0 : i32
    return %c0_i32, %c0_i32_0 : i32, i32
  }
  func.func @transform_2(%arg0: i32) -> (i32, i32) {
    %c0_i32 = arith.constant 0 : i32
    %c0_i32_0 = arith.constant 0 : i32
    %c0_i32_1 = arith.constant 0 : i32
    return %c0_i32, %c0_i32_0 : i32, i32
  }
  func.func @transform_3(%arg0: i32) -> (i32, i32) {
    %c0_i32 = arith.constant 0 : i32
    %c0_i32_0 = arith.constant 0 : i32
    %c0_i32_1 = arith.constant 0 : i32
    return %c0_i32, %c0_i32_0 : i32, i32
  }
  func.func @transform_4(%arg0: i32) -> (i32, i32) {
    %c0_i32 = arith.constant 0 : i32
    %c0_i32_0 = arith.constant 0 : i32
    %c0_i32_1 = arith.constant 0 : i32
    return %c0_i32, %c0_i32_0 : i32, i32
  }
  func.func @transform_5(%arg0: i32) -> (i32, i32) {
    %c0_i32 = arith.constant 0 : i32
    %c0_i32_0 = arith.constant 0 : i32
    %c0_i32_1 = arith.constant 0 : i32
    return %c0_i32, %c0_i32_0 : i32, i32
  }
  func.func @transform_6(%arg0: i32) -> (i32, i32) {
    %c0_i32 = arith.constant 0 : i32
    %c0_i32_0 = arith.constant 0 : i32
    %c0_i32_1 = arith.constant 0 : i32
    return %c0_i32, %c0_i32_0 : i32, i32
  }
  func.func @transform_7(%arg0: i32) -> (i32, i32) {
    %c0_i32 = arith.constant 0 : i32
    %c0_i32_0 = arith.constant 0 : i32
    %c0_i32_1 = arith.constant 0 : i32
    return %c0_i32, %c0_i32_0 : i32, i32
  }
  func.func @transform_8(%arg0: i32) -> (i32, i32) {
    %c0_i32 = arith.constant 0 : i32
    %c0_i32_0 = arith.constant 0 : i32
    %c0_i32_1 = arith.constant 0 : i32
    return %c0_i32, %c0_i32_0 : i32, i32
  }
  func.func @transform_9(%arg0: i32) -> (i32, i32) {
    %c0_i32 = arith.constant 0 : i32
    %c0_i32_0 = arith.constant 0 : i32
    %c0_i32_1 = arith.constant 0 : i32
    return %c0_i32, %c0_i32_0 : i32, i32
  }
  func.func @transform_10(%arg0: i32) -> (i32, i32) {
    %c0_i32 = arith.constant 0 : i32
    %c0_i32_0 = arith.constant 0 : i32
    %c0_i32_1 = arith.constant 0 : i32
    return %c0_i32, %c0_i32_0 : i32, i32
  }
  func.func @transform_11(%arg0: i32) -> (i32, i32) {
    %c0_i32 = arith.constant 0 : i32
    %c0_i32_0 = arith.constant 0 : i32
    %c0_i32_1 = arith.constant 0 : i32
    return %c0_i32, %c0_i32_0 : i32, i32
  }
  func.func @transform_12(%arg0: i32) -> (i32, i32) {
    %c0_i32 = arith.constant 0 : i32
    %c0_i32_0 = arith.constant 0 : i32
    %c0_i32_1 = arith.constant 0 : i32
    return %c0_i32, %c0_i32_0 : i32, i32
  }
  func.func @transform_13(%arg0: i32) -> (i32, i32) {
    %c0_i32 = arith.constant 0 : i32
    %c0_i32_0 = arith.constant 0 : i32
    %c0_i32_1 = arith.constant 0 : i32
    return %c0_i32, %c0_i32_0 : i32, i32
  }
  func.func @transform_14(%arg0: i32) -> (i32, i32) {
    %c0_i32 = arith.constant 0 : i32
    %c0_i32_0 = arith.constant 0 : i32
    %c0_i32_1 = arith.constant 0 : i32
    return %c0_i32, %c0_i32_0 : i32, i32
  }
  func.func @transform_15(%arg0: i32) -> (i32, i32) {
    %c0_i32 = arith.constant 0 : i32
    %c0_i32_0 = arith.constant 0 : i32
    return %arg0, %c0_i32 : i32, i32
  }
}

</mosaic_0001>

<llo_original>
// kernel: tpu_custom_call.1
$region0: #{tpu_custom_call.1}
  #allocation0 [shape = 'u32[]', space=smem, size = 0x4, offset = 0x4, fixed_abs, tag = 'smem constant byte address 0x4 - core index']
  #allocation1 [shape = 'u32[144,128]{1,0:T(1,128)}', space=vmem, size = 0x12000, scoped, tag = 'internal scratch']
  %s0 = inlined_call_operand.vmem [shape: f32[8,32], index: 0, kind: input, shape index: {}]
  %s1 = inlined_call_operand.vmem [shape: f32[32,128], index: 1, kind: input, shape index: {}]
  %s2 = inlined_call_operand.vmem [shape: f32[1,128], index: 2, kind: input, shape index: {}]
  %s3 = inlined_call_operand.vmem [shape: f32[1,128], index: 3, kind: input, shape index: {}]
  %s4 = inlined_call_operand.vmem [shape: f32[1,128], index: 4, kind: input, shape index: {}]
  %s5 = inlined_call_operand.vmem [shape: f32[128,128], index: 5, kind: input, shape index: {}]
  %s6 = inlined_call_operand.vmem [shape: f32[1,128], index: 6, kind: input, shape index: {}]
  %s7 = inlined_call_operand.vmem [shape: f32[1,128], index: 7, kind: input, shape index: {}]
  %s8 = inlined_call_operand.vmem [shape: f32[1,128], index: 8, kind: input, shape index: {}]
  %s9 = inlined_call_operand.vmem [shape: f32[128,64], index: 9, kind: input, shape index: {}]
  %s10 = inlined_call_operand.vmem [shape: f32[1,64], index: 10, kind: input, shape index: {}]
  %s11 = inlined_call_operand.vmem [shape: f32[1,64], index: 11, kind: input, shape index: {}]
  %s12 = inlined_call_operand.vmem [shape: f32[1,64], index: 12, kind: input, shape index: {}]
  %s13 = inlined_call_operand.vmem [shape: f32[64,16], index: 13, kind: input, shape index: {}]
  %s14 = inlined_call_operand.vmem [shape: f32[1,16], index: 14, kind: input, shape index: {}]
  %s15 = inlined_call_operand.hbm [shape: f32[8,16], index: 15, kind: output, shape index: {}]
  %s16 = sld [smem:[#allocation0]]
  $region70: #{tpu_custom_call.1} parent=0
    _
  %s18 = ssub.s32 1, %s16
  %s19 = scalar_select 0, %s18, %s16
  $region1: #{tpu_custom_call.1} parent=0
    #allocation2 [shape = 'u8[4096]{0}', space=vmem, size = 0x1000, scoped, tag = 'output window, operand 0, single buffered']
    #allocation3 [shape = 's32[1]{0}', space=sflag, size = 0x4, scoped, tag = 'scoped memory for tpu_custom_call.1']
    %20 = vsyncpa [#allocation3], 0
    // Predicated region
    $region2: #{tpu_custom_call.1} parent=1 // pred_check
      _
    $region3: #{tpu_custom_call.1} parent=1 // pred_check_branch
      %22 = sbr.rel (0) target = $region5
    $region4: #{tpu_custom_call.1} parent=1 // pred_region
      _
    $region5: #{tpu_custom_call.1} parent=1 // pred_fallthru
      _
    // Predicated region
    $region6: #{tpu_custom_call.1} parent=1 // pred_check
      _
    $region7: #{tpu_custom_call.1} parent=1 // pred_check_branch
      %24 = sbr.rel (0) target = $region9
    $region8: #{tpu_custom_call.1} parent=1 // pred_region
      _
    $region9: #{tpu_custom_call.1} parent=1 // pred_fallthru
      _
    // Predicated region
    $region10: #{tpu_custom_call.1} parent=1 // pred_check
      _
    $region11: #{tpu_custom_call.1} parent=1 // pred_check_branch
      %26 = sbr.rel (0) target = $region13
    $region12: #{tpu_custom_call.1} parent=1 // pred_region
      _
    $region13: #{tpu_custom_call.1} parent=1 // pred_fallthru
      _
    // Predicated region
    $region14: #{tpu_custom_call.1} parent=1 // pred_check
      _
    $region15: #{tpu_custom_call.1} parent=1 // pred_check_branch
      %28 = sbr.rel (0) target = $region17
    $region16: #{tpu_custom_call.1} parent=1 // pred_region
      _
    $region17: #{tpu_custom_call.1} parent=1 // pred_fallthru
      _
    // Predicated region
    $region18: #{tpu_custom_call.1} parent=1 // pred_check
      _
    $region19: #{tpu_custom_call.1} parent=1 // pred_check_branch
      %30 = sbr.rel (0) target = $region21
    $region20: #{tpu_custom_call.1} parent=1 // pred_region
      _
    $region21: #{tpu_custom_call.1} parent=1 // pred_fallthru
      _
    // Predicated region
    $region22: #{tpu_custom_call.1} parent=1 // pred_check
      _
    $region23: #{tpu_custom_call.1} parent=1 // pred_check_branch
      %32 = sbr.rel (0) target = $region25
    $region24: #{tpu_custom_call.1} parent=1 // pred_region
      _
    $region25: #{tpu_custom_call.1} parent=1 // pred_fallthru
      _
    // Predicated region
    $region26: #{tpu_custom_call.1} parent=1 // pred_check
      _
    $region27: #{tpu_custom_call.1} parent=1 // pred_check_branch
      %34 = sbr.rel (0) target = $region29
    $region28: #{tpu_custom_call.1} parent=1 // pred_region
      _
    $region29: #{tpu_custom_call.1} parent=1 // pred_fallthru
      _
    // Predicated region
    $region30: #{tpu_custom_call.1} parent=1 // pred_check
      _
    $region31: #{tpu_custom_call.1} parent=1 // pred_check_branch
      %36 = sbr.rel (0) target = $region33
    $region32: #{tpu_custom_call.1} parent=1 // pred_region
      _
    $region33: #{tpu_custom_call.1} parent=1 // pred_fallthru
      _
    // Predicated region
    $region34: #{tpu_custom_call.1} parent=1 // pred_check
      _
    $region35: #{tpu_custom_call.1} parent=1 // pred_check_branch
      %38 = sbr.rel (0) target = $region37
    $region36: #{tpu_custom_call.1} parent=1 // pred_region
      _
    $region37: #{tpu_custom_call.1} parent=1 // pred_fallthru
      _
    // Predicated region
    $region38: #{tpu_custom_call.1} parent=1 // pred_check
      _
    $region39: #{tpu_custom_call.1} parent=1 // pred_check_branch
      %40 = sbr.rel (0) target = $region41
    $region40: #{tpu_custom_call.1} parent=1 // pred_region
      _
    $region41: #{tpu_custom_call.1} parent=1 // pred_fallthru
      _
    // Predicated region
    $region42: #{tpu_custom_call.1} parent=1 // pred_check
      _
    $region43: #{tpu_custom_call.1} parent=1 // pred_check_branch
      %42 = sbr.rel (0) target = $region45
    $region44: #{tpu_custom_call.1} parent=1 // pred_region
      _
    $region45: #{tpu_custom_call.1} parent=1 // pred_fallthru
      _
    // Predicated region
    $region46: #{tpu_custom_call.1} parent=1 // pred_check
      _
    $region47: #{tpu_custom_call.1} parent=1 // pred_check_branch
      %44 = sbr.rel (0) target = $region49
    $region48: #{tpu_custom_call.1} parent=1 // pred_region
      _
    $region49: #{tpu_custom_call.1} parent=1 // pred_fallthru
      _
    // Predicated region
    $region50: #{tpu_custom_call.1} parent=1 // pred_check
      _
    $region51: #{tpu_custom_call.1} parent=1 // pred_check_branch
      %46 = sbr.rel (0) target = $region53
    $region52: #{tpu_custom_call.1} parent=1 // pred_region
      _
    $region53: #{tpu_custom_call.1} parent=1 // pred_fallthru
      _
    // Predicated region
    $region54: #{tpu_custom_call.1} parent=1 // pred_check
      _
    $region55: #{tpu_custom_call.1} parent=1 // pred_check_branch
      %48 = sbr.rel (0) target = $region57
    $region56: #{tpu_custom_call.1} parent=1 // pred_region
      _
    $region57: #{tpu_custom_call.1} parent=1 // pred_fallthru
      _
    // Predicated region
    $region58: #{tpu_custom_call.1} parent=1 // pred_check
      _
    $region59: #{tpu_custom_call.1} parent=1 // pred_check_branch
      %50 = sbr.rel (0) target = $region61
    $region60: #{tpu_custom_call.1} parent=1 // pred_region
      _
    $region61: #{tpu_custom_call.1} parent=1 // pred_fallthru
      _
    %v51 = vld [vmem:[%s0] sm:$0xff]
    %v52 = vld [vmem:[%s1] sm:$0xff]
    %v53 = vld [vmem:[%s1 + $0x8] sm:$0xff]
    %v54 = vld [vmem:[%s1 + $0x10] sm:$0xff]
    %v55 = vld [vmem:[%s1 + $0x18] sm:$0xff]
    %v56 = vld [vmem:[%s2] sm:$0x1]
    %v58 = vlaneseq
    %v59 = vshrl.u32 %v58, 7
    %v60 = vsub.s32 0, %v59
    %v61 = vrot.slane %v56, %v60
    %vm63 = vcmask 261120
    %v65 = vsel %vm63, %v51, 0
    %67 = vmatprep.subr.mxu0 0.0
    %68 = vmatpush1.msra.mxu0 0.0
    %69 = vmatprep.subr.mxu0 0.0
    %70 = vmatpush1.msra.mxu0 0.0
    %71 = vmatprep.subr.mxu0 0.0
    %72 = vmatpush1.msra.mxu0 0.0
    %73 = vmatprep.subr.mxu0 0.0
    %74 = vmatpush1.msra.mxu0 0.0
    %75 = vmatprep.subr.mxu0 0.0
    %76 = vmatpush1.msra.mxu0 0.0
    %77 = vmatprep.subr.mxu0 0.0
    %78 = vmatpush1.msra.mxu0 0.0
    %79 = vmatprep.subr.mxu0 0.0
    %80 = vmatpush1.msra.mxu0 0.0
    %81 = vmatprep.subr.mxu0 0.0
    %82 = vmatpush1.msra.mxu0 0.0
    %83 = vmatprep.subr.mxu0 0.0
    %84 = vmatpush1.msra.mxu0 0.0
    %85 = vmatprep.subr.mxu0 0.0
    %86 = vmatpush1.msra.mxu0 0.0
    %87 = vmatprep.subr.mxu0 0.0
    %88 = vmatpush1.msra.mxu0 0.0
    %89 = vmatprep.subr.mxu0 0.0
    %90 = vmatpush1.msra.mxu0 0.0
    %91 = vmatprep.subr.mxu0 0.0
    %92 = vmatpush1.msra.mxu0 %v55
    %93 = vmatprep.subr.mxu0 0.0
    %94 = vmatpush1.msra.mxu0 %v54
    %95 = vmatprep.subr.mxu0 0.0
    %96 = vmatpush1.msra.mxu0 %v53
    %97 = vmatprep.subr.mxu0 0.0
    %98 = vmatpush1.msra.mxu0 %v52
    %99 = vmatprep.subr.mxu0 0.0
    %100 = vmatpush2.msra.mxu0 0.0
    %101 = vmatprep.subr.mxu0 0.0
    %102 = vmatpush2.msra.mxu0 0.0
    %103 = vmatprep.subr.mxu0 0.0
    %104 = vmatpush2.msra.mxu0 0.0
    %105 = vmatprep.subr.mxu0 0.0
    %106 = vmatpush2.msra.mxu0 0.0
    %107 = vmatprep.subr.mxu0 0.0
    %108 = vmatpush2.msra.mxu0 0.0
    %109 = vmatprep.subr.mxu0 0.0
    %110 = vmatpush2.msra.mxu0 0.0
    %111 = vmatprep.subr.mxu0 0.0
    %112 = vmatpush2.msra.mxu0 0.0
    %113 = vmatprep.subr.mxu0 0.0
    %114 = vmatpush2.msra.mxu0 0.0
    %115 = vmatprep.subr.mxu0 0.0
    %116 = vmatpush2.msra.mxu0 0.0
    %117 = vmatprep.subr.mxu0 0.0
    %118 = vmatpush2.msra.mxu0 0.0
    %119 = vmatprep.subr.mxu0 0.0
    %120 = vmatpush2.msra.mxu0 0.0
    %121 = vmatprep.subr.mxu0 0.0
    %122 = vmatpush2.msra.mxu0 0.0
    %123 = vmatprep.subr.mxu0 0.0
    %124 = vmatpush2.msra.mxu0 0.0
    %125 = vmatprep.subr.mxu0 0.0
    %126 = vmatpush2.msra.mxu0 0.0
    %127 = vmatprep.subr.mxu0 0.0
    %128 = vmatpush2.msra.mxu0 0.0
    %129 = vmatprep.subr.mxu0 0.0
    %130 = vmatpush2.msra.mxu0 0.0
    %131 = vmatprep.mubr.f32.mxu0 0.0
    %132 = vmatmul.mubr.f32.gmra.mxu0 %v65
    %v133 = vpop.f32.mrf.mxu0
    %v134 = vadd.f32 %v61, %v133
    %v135 = vpop.f32.mrf.mxu0
    %136 = vdwg.mxu0
    %v137 = vld [vmem:[%s3] sm:$0x1]
    %v138 = vld [vmem:[%s4] sm:$0x1]
    %139 = vadd.xlane.f32.xlu0 %v134
    %v140 = vpop.xlane.xlu0 %139
    %v141 = vmul.f32 %v134, %v134
    %142 = vadd.xlane.f32.xlu0 %v141
    %v143 = vpop.xlane.xlu0 %142
    %v144 = vmul.f32 %v140, 0.0078125
    %v145 = vmul.f32 %v143, 0.0078125
    %v146 = vmul.f32 %v144, %v144
    %v147 = vsub.f32 %v145, %v146
    %v148 = vmax.f32 %v147, 0.0
    %v149 = vsub.f32 %v134, %v144
    %v150 = vadd.f32 %v148, 1e-05
    %v151 = vrsqrt.pop %v150
    %v152 = vmul.f32 %v149, %v151
    %v154 = vlaneseq
    %v155 = vshrl.u32 %v154, 7
    %v156 = vsub.s32 0, %v155
    %v157 = vrot.slane %v137, %v156
    %v159 = vmul.f32 %v152, %v157
    %v161 = vlaneseq
    %v162 = vshrl.u32 %v161, 7
    %v163 = vsub.s32 0, %v162
    %v164 = vrot.slane %v138, %v163
    %v166 = vadd.f32 %v159, %v164
    %v167 = vmax.f32 %v166, 0.0
    %v168 = vld [vmem:[%s5] sm:$0xff]
    %v169 = vld [vmem:[%s5 + $0x8] sm:$0xff]
    %v170 = vld [vmem:[%s5 + $0x10] sm:$0xff]
    %v171 = vld [vmem:[%s5 + $0x18] sm:$0xff]
    %v172 = vld [vmem:[%s5 + $0x20] sm:$0xff]
    %v173 = vld [vmem:[%s5 + $0x28] sm:$0xff]
    %v174 = vld [vmem:[%s5 + $0x30] sm:$0xff]
    %v175 = vld [vmem:[%s5 + $0x38] sm:$0xff]
    %v176 = vld [vmem:[%s5 + $0x40] sm:$0xff]
    %v177 = vld [vmem:[%s5 + $0x48] sm:$0xff]
    %v178 = vld [vmem:[%s5 + $0x50] sm:$0xff]
    %v179 = vld [vmem:[%s5 + $0x58] sm:$0xff]
    %v180 = vld [vmem:[%s5 + $0x60] sm:$0xff]
    %v181 = vld [vmem:[%s5 + $0x68] sm:$0xff]
    %v182 = vld [vmem:[%s5 + $0x70] sm:$0xff]
    %v183 = vld [vmem:[%s5 + $0x78] sm:$0xff]
    %v184 = vld [vmem:[%s6] sm:$0x1]
    %v186 = vlaneseq
    %v187 = vshrl.u32 %v186, 7
    %v188 = vsub.s32 0, %v187
    %v189 = vrot.slane %v184, %v188
    %191 = vmatprep.subr.mxu0 0.0
    %192 = vmatpush1.msra.mxu0 %v183
    %193 = vmatprep.subr.mxu0 0.0
    %194 = vmatpush1.msra.mxu0 %v182
    %195 = vmatprep.subr.mxu0 0.0
    %196 = vmatpush1.msra.mxu0 %v181
    %197 = vmatprep.subr.mxu0 0.0
    %198 = vmatpush1.msra.mxu0 %v180
    %199 = vmatprep.subr.mxu0 0.0
    %200 = vmatpush1.msra.mxu0 %v179
    %201 = vmatprep.subr.mxu0 0.0
    %202 = vmatpush1.msra.mxu0 %v178
    %203 = vmatprep.subr.mxu0 0.0
    %204 = vmatpush1.msra.mxu0 %v177
    %205 = vmatprep.subr.mxu0 0.0
    %206 = vmatpush1.msra.mxu0 %v176
    %207 = vmatprep.subr.mxu0 0.0
    %208 = vmatpush1.msra.mxu0 %v175
    %209 = vmatprep.subr.mxu0 0.0
    %210 = vmatpush1.msra.mxu0 %v174
    %211 = vmatprep.subr.mxu0 0.0
    %212 = vmatpush1.msra.mxu0 %v173
    %213 = vmatprep.subr.mxu0 0.0
    %214 = vmatpush1.msra.mxu0 %v172
    %215 = vmatprep.subr.mxu0 0.0
    %216 = vmatpush1.msra.mxu0 %v171
    %217 = vmatprep.subr.mxu0 0.0
    %218 = vmatpush1.msra.mxu0 %v170
    %219 = vmatprep.subr.mxu0 0.0
    %220 = vmatpush1.msra.mxu0 %v169
    %221 = vmatprep.subr.mxu0 0.0
    %222 = vmatpush1.msra.mxu0 %v168
    %223 = vmatprep.subr.mxu0 0.0
    %224 = vmatpush2.msra.mxu0 0.0
    %225 = vmatprep.subr.mxu0 0.0
    %226 = vmatpush2.msra.mxu0 0.0
    %227 = vmatprep.subr.mxu0 0.0
    %228 = vmatpush2.msra.mxu0 0.0
    %229 = vmatprep.subr.mxu0 0.0
    %230 = vmatpush2.msra.mxu0 0.0
    %231 = vmatprep.subr.mxu0 0.0
    %232 = vmatpush2.msra.mxu0 0.0
    %233 = vmatprep.subr.mxu0 0.0
    %234 = vmatpush2.msra.mxu0 0.0
    %235 = vmatprep.subr.mxu0 0.0
    %236 = vmatpush2.msra.mxu0 0.0
    %237 = vmatprep.subr.mxu0 0.0
    %238 = vmatpush2.msra.mxu0 0.0
    %239 = vmatprep.subr.mxu0 0.0
    %240 = vmatpush2.msra.mxu0 0.0
    %241 = vmatprep.subr.mxu0 0.0
    %242 = vmatpush2.msra.mxu0 0.0
    %243 = vmatprep.subr.mxu0 0.0
    %244 = vmatpush2.msra.mxu0 0.0
    %245 = vmatprep.subr.mxu0 0.0
    %246 = vmatpush2.msra.mxu0 0.0
    %247 = vmatprep.subr.mxu0 0.0
    %248 = vmatpush2.msra.mxu0 0.0
    %249 = vmatprep.subr.mxu0 0.0
    %250 = vmatpush2.msra.mxu0 0.0
    %251 = vmatprep.subr.mxu0 0.0
    %252 = vmatpush2.msra.mxu0 0.0
    %253 = vmatprep.subr.mxu0 0.0
    %254 = vmatpush2.msra.mxu0 0.0
    %255 = vmatprep.mubr.f32.mxu0 0.0
    %256 = vmatmul.mubr.f32.gmra.mxu0 %v167
    %v257 = vpop.f32.mrf.mxu0
    %v258 = vadd.f32 %v189, %v257
    %v259 = vpop.f32.mrf.mxu0
    %260 = vdwg.mxu0
    %v261 = vld [vmem:[%s7] sm:$0x1]
    %v262 = vld [vmem:[%s8] sm:$0x1]
    %263 = vadd.xlane.f32.xlu0 %v258
    %v264 = vpop.xlane.xlu0 %263
    %v265 = vmul.f32 %v258, %v258
    %266 = vadd.xlane.f32.xlu0 %v265
    %v267 = vpop.xlane.xlu0 %266
    %v268 = vmul.f32 %v264, 0.0078125
    %v269 = vmul.f32 %v267, 0.0078125
    %v270 = vmul.f32 %v268, %v268
    %v271 = vsub.f32 %v269, %v270
    %v272 = vmax.f32 %v271, 0.0
    %v273 = vsub.f32 %v258, %v268
    %v274 = vadd.f32 %v272, 1e-05
    %v275 = vrsqrt.pop %v274
    %v276 = vmul.f32 %v273, %v275
    %v278 = vlaneseq
    %v279 = vshrl.u32 %v278, 7
    %v280 = vsub.s32 0, %v279
    %v281 = vrot.slane %v261, %v280
    %v283 = vmul.f32 %v276, %v281
    %v285 = vlaneseq
    %v286 = vshrl.u32 %v285, 7
    %v287 = vsub.s32 0, %v286
    %v288 = vrot.slane %v262, %v287
    %v290 = vadd.f32 %v283, %v288
    %v291 = vmax.f32 %v290, 0.0
    %v292 = vld [vmem:[%s9] sm:$0xff]
    %v293 = vld [vmem:[%s9 + $0x8] sm:$0xff]
    %v294 = vld [vmem:[%s9 + $0x10] sm:$0xff]
    %v295 = vld [vmem:[%s9 + $0x18] sm:$0xff]
    %v296 = vld [vmem:[%s9 + $0x20] sm:$0xff]
    %v297 = vld [vmem:[%s9 + $0x28] sm:$0xff]
    %v298 = vld [vmem:[%s9 + $0x30] sm:$0xff]
    %v299 = vld [vmem:[%s9 + $0x38] sm:$0xff]
    %v300 = vld [vmem:[%s9 + $0x40] sm:$0xff]
    %v301 = vld [vmem:[%s9 + $0x48] sm:$0xff]
    %v302 = vld [vmem:[%s9 + $0x50] sm:$0xff]
    %v303 = vld [vmem:[%s9 + $0x58] sm:$0xff]
    %v304 = vld [vmem:[%s9 + $0x60] sm:$0xff]
    %v305 = vld [vmem:[%s9 + $0x68] sm:$0xff]
    %v306 = vld [vmem:[%s9 + $0x70] sm:$0xff]
    %v307 = vld [vmem:[%s9 + $0x78] sm:$0xff]
    %v308 = vld [vmem:[%s10] sm:$0x1]
    %v310 = vlaneseq
    %v311 = vshrl.u32 %v310, 7
    %v312 = vsub.s32 0, %v311
    %v313 = vrot.slane %v308, %v312
    %315 = vmatprep.subr.mxu0 0.0
    %316 = vmatpush1.msra.mxu0 %v307
    %317 = vmatprep.subr.mxu0 0.0
    %318 = vmatpush1.msra.mxu0 %v306
    %319 = vmatprep.subr.mxu0 0.0
    %320 = vmatpush1.msra.mxu0 %v305
    %321 = vmatprep.subr.mxu0 0.0
    %322 = vmatpush1.msra.mxu0 %v304
    %323 = vmatprep.subr.mxu0 0.0
    %324 = vmatpush1.msra.mxu0 %v303
    %325 = vmatprep.subr.mxu0 0.0
    %326 = vmatpush1.msra.mxu0 %v302
    %327 = vmatprep.subr.mxu0 0.0
    %328 = vmatpush1.msra.mxu0 %v301
    %329 = vmatprep.subr.mxu0 0.0
    %330 = vmatpush1.msra.mxu0 %v300
    %331 = vmatprep.subr.mxu0 0.0
    %332 = vmatpush1.msra.mxu0 %v299
    %333 = vmatprep.subr.mxu0 0.0
    %334 = vmatpush1.msra.mxu0 %v298
    %335 = vmatprep.subr.mxu0 0.0
    %336 = vmatpush1.msra.mxu0 %v297
    %337 = vmatprep.subr.mxu0 0.0
    %338 = vmatpush1.msra.mxu0 %v296
    %339 = vmatprep.subr.mxu0 0.0
    %340 = vmatpush1.msra.mxu0 %v295
    %341 = vmatprep.subr.mxu0 0.0
    %342 = vmatpush1.msra.mxu0 %v294
    %343 = vmatprep.subr.mxu0 0.0
    %344 = vmatpush1.msra.mxu0 %v293
    %345 = vmatprep.subr.mxu0 0.0
    %346 = vmatpush1.msra.mxu0 %v292
    %347 = vmatprep.subr.mxu0 0.0
    %348 = vmatpush2.msra.mxu0 0.0
    %349 = vmatprep.subr.mxu0 0.0
    %350 = vmatpush2.msra.mxu0 0.0
    %351 = vmatprep.subr.mxu0 0.0
    %352 = vmatpush2.msra.mxu0 0.0
    %353 = vmatprep.subr.mxu0 0.0
    %354 = vmatpush2.msra.mxu0 0.0
    %355 = vmatprep.subr.mxu0 0.0
    %356 = vmatpush2.msra.mxu0 0.0
    %357 = vmatprep.subr.mxu0 0.0
    %358 = vmatpush2.msra.mxu0 0.0
    %359 = vmatprep.subr.mxu0 0.0
    %360 = vmatpush2.msra.mxu0 0.0
    %361 = vmatprep.subr.mxu0 0.0
    %362 = vmatpush2.msra.mxu0 0.0
    %363 = vmatprep.subr.mxu0 0.0
    %364 = vmatpush2.msra.mxu0 0.0
    %365 = vmatprep.subr.mxu0 0.0
    %366 = vmatpush2.msra.mxu0 0.0
    %367 = vmatprep.subr.mxu0 0.0
    %368 = vmatpush2.msra.mxu0 0.0
    %369 = vmatprep.subr.mxu0 0.0
    %370 = vmatpush2.msra.mxu0 0.0
    %371 = vmatprep.subr.mxu0 0.0
    %372 = vmatpush2.msra.mxu0 0.0
    %373 = vmatprep.subr.mxu0 0.0
    %374 = vmatpush2.msra.mxu0 0.0
    %375 = vmatprep.subr.mxu0 0.0
    %376 = vmatpush2.msra.mxu0 0.0
    %377 = vmatprep.subr.mxu0 0.0
    %378 = vmatpush2.msra.mxu0 0.0
    %379 = vmatprep.mubr.f32.mxu0 0.0
    %380 = vmatmul.mubr.f32.gmra.mxu0 %v291
    %v381 = vpop.f32.mrf.mxu0
    %v382 = vadd.f32 %v313, %v381
    %v383 = vpop.f32.mrf.mxu0
    %384 = vdwg.mxu0
    %v385 = vld [vmem:[%s11] sm:$0x1]
    %v386 = vld [vmem:[%s12] sm:$0x1]
    %vm387 = vcmask 523264
    %v388 = vsel %vm387, %v382, 0.0
    %389 = vadd.xlane.f32.xlu0 %v388
    %v390 = vpop.xlane.xlu0 %389
    %v391 = vmul.f32 %v382, %v382
    %v392 = vsel %vm387, %v391, 0.0
    %393 = vadd.xlane.f32.xlu0 %v392
    %v394 = vpop.xlane.xlu0 %393
    %v395 = vmul.f32 %v390, 0.015625
    %v396 = vmul.f32 %v394, 0.015625
    %v397 = vmul.f32 %v395, %v395
    %v398 = vsub.f32 %v396, %v397
    %v399 = vmax.f32 %v398, 0.0
    %v400 = vsub.f32 %v382, %v395
    %v401 = vadd.f32 %v399, 1e-05
    %v402 = vrsqrt.pop %v401
    %v403 = vmul.f32 %v400, %v402
    %v405 = vlaneseq
    %v406 = vshrl.u32 %v405, 7
    %v407 = vsub.s32 0, %v406
    %v408 = vrot.slane %v385, %v407
    %v410 = vmul.f32 %v403, %v408
    %v412 = vlaneseq
    %v413 = vshrl.u32 %v412, 7
    %v414 = vsub.s32 0, %v413
    %v415 = vrot.slane %v386, %v414
    %v417 = vadd.f32 %v410, %v415
    %v418 = vmax.f32 %v417, 0.0
    %v419 = vld [vmem:[%s13] sm:$0xff]
    %v420 = vld [vmem:[%s13 + $0x8] sm:$0xff]
    %v421 = vld [vmem:[%s13 + $0x10] sm:$0xff]
    %v422 = vld [vmem:[%s13 + $0x18] sm:$0xff]
    %v423 = vld [vmem:[%s13 + $0x20] sm:$0xff]
    %v424 = vld [vmem:[%s13 + $0x28] sm:$0xff]
    %v425 = vld [vmem:[%s13 + $0x30] sm:$0xff]
    %v426 = vld [vmem:[%s13 + $0x38] sm:$0xff]
    %v427 = vld [vmem:[%s14] sm:$0x1]
    %v429 = vlaneseq
    %v430 = vshrl.u32 %v429, 7
    %v431 = vsub.s32 0, %v430
    %v432 = vrot.slane %v427, %v431
    %v435 = vsel %vm387, %v418, 0
    %437 = vmatprep.subr.mxu0 0.0
    %438 = vmatpush1.msra.mxu0 0.0
    %439 = vmatprep.subr.mxu0 0.0
    %440 = vmatpush1.msra.mxu0 0.0
    %441 = vmatprep.subr.mxu0 0.0
    %442 = vmatpush1.msra.mxu0 0.0
    %443 = vmatprep.subr.mxu0 0.0
    %444 = vmatpush1.msra.mxu0 0.0
    %445 = vmatprep.subr.mxu0 0.0
    %446 = vmatpush1.msra.mxu0 0.0
    %447 = vmatprep.subr.mxu0 0.0
    %448 = vmatpush1.msra.mxu0 0.0
    %449 = vmatprep.subr.mxu0 0.0
    %450 = vmatpush1.msra.mxu0 0.0
    %451 = vmatprep.subr.mxu0 0.0
    %452 = vmatpush1.msra.mxu0 0.0
    %453 = vmatprep.subr.mxu0 0.0
    %454 = vmatpush1.msra.mxu0 %v426
    %455 = vmatprep.subr.mxu0 0.0
    %456 = vmatpush1.msra.mxu0 %v425
    %457 = vmatprep.subr.mxu0 0.0
    %458 = vmatpush1.msra.mxu0 %v424
    %459 = vmatprep.subr.mxu0 0.0
    %460 = vmatpush1.msra.mxu0 %v423
    %461 = vmatprep.subr.mxu0 0.0
    %462 = vmatpush1.msra.mxu0 %v422
    %463 = vmatprep.subr.mxu0 0.0
    %464 = vmatpush1.msra.mxu0 %v421
    %465 = vmatprep.subr.mxu0 0.0
    %466 = vmatpush1.msra.mxu0 %v420
    %467 = vmatprep.subr.mxu0 0.0
    %468 = vmatpush1.msra.mxu0 %v419
    %469 = vmatprep.subr.mxu0 0.0
    %470 = vmatpush2.msra.mxu0 0.0
    %471 = vmatprep.subr.mxu0 0.0
    %472 = vmatpush2.msra.mxu0 0.0
    %473 = vmatprep.subr.mxu0 0.0
    %474 = vmatpush2.msra.mxu0 0.0
    %475 = vmatprep.subr.mxu0 0.0
    %476 = vmatpush2.msra.mxu0 0.0
    %477 = vmatprep.subr.mxu0 0.0
    %478 = vmatpush2.msra.mxu0 0.0
    %479 = vmatprep.subr.mxu0 0.0
    %480 = vmatpush2.msra.mxu0 0.0
    %481 = vmatprep.subr.mxu0 0.0
    %482 = vmatpush2.msra.mxu0 0.0
    %483 = vmatprep.subr.mxu0 0.0
    %484 = vmatpush2.msra.mxu0 0.0
    %485 = vmatprep.subr.mxu0 0.0
    %486 = vmatpush2.msra.mxu0 0.0
    %487 = vmatprep.subr.mxu0 0.0
    %488 = vmatpush2.msra.mxu0 0.0
    %489 = vmatprep.subr.mxu0 0.0
    %490 = vmatpush2.msra.mxu0 0.0
    %491 = vmatprep.subr.mxu0 0.0
    %492 = vmatpush2.msra.mxu0 0.0
    %493 = vmatprep.subr.mxu0 0.0
    %494 = vmatpush2.msra.mxu0 0.0
    %495 = vmatprep.subr.mxu0 0.0
    %496 = vmatpush2.msra.mxu0 0.0
    %497 = vmatprep.subr.mxu0 0.0
    %498 = vmatpush2.msra.mxu0 0.0
    %499 = vmatprep.subr.mxu0 0.0
    %500 = vmatpush2.msra.mxu0 0.0
    %501 = vmatprep.mubr.f32.mxu0 0.0
    %502 = vmatmul.mubr.f32.gmra.mxu0 %v435
    %v503 = vpop.f32.mrf.mxu0
    %v504 = vadd.f32 %v432, %v503
    %v505 = vpop.f32.mrf.mxu0
    %506 = vdwg.mxu0
    %v507 = vand.u32 2147483647, %v504
    %v508 = vsub.f32 0.0, %v507
    %v509 = vmul.f32 %v508, 1.442695
    %v510 = vpow.pop %v509
    %v511 = vadd.f32 %v510, 1.0
    %v512 = vrcp.pop %v511
    %v513 = vmul.f32 %v511, %v512
    %v514 = vsub.f32 2.0, %v513
    %v515 = vmul.f32 %v512, %v514
    %vm516 = vcmp.ge.f32.partialorder %v504, 0.0
    %v517 = vmul.f32 %v510, %v515
    %v518 = vsel %vm516, %v515, %v517
    %vm519 = vcmask 130048
    %520 = vst.msk [vmem:[#allocation2] sm:$0xff] %vm519, %v518
    // Predicated region
    $region62: #{tpu_custom_call.1} parent=1 // pred_check
      _
    $region63: #{tpu_custom_call.1} parent=1 // pred_check_branch
      %522 = sbr.rel (0) target = $region65
    $region64: #{tpu_custom_call.1} parent=1 // pred_region
      %s524 = ssub.s32 128, 128
      %525 = vsyncadd [#allocation3], %s524
      %s527 = sshll.u32 [#allocation2], 4
      %s528 = int_to_ptr.vmem [resolvable:$true] %s527
      %530 = dma.vmem_to_hbm [thread:$0]  %s528, 128, %s15, [#allocation3]
    $region65: #{tpu_custom_call.1} parent=1 // pred_fallthru
      _
    // Predicated region
    $region66: #{tpu_custom_call.1} parent=1 // pred_check
      _
    $region67: #{tpu_custom_call.1} parent=1 // pred_check_branch
      %532 = sbr.rel (0) target = $region69
    $region68: #{tpu_custom_call.1} parent=1 // pred_region
      %533 = dma.done [#allocation3], 128
    $region69: #{tpu_custom_call.1} parent=1 // pred_fallthru
      _
    %534 = vsyncpa [#allocation3], 1

</llo_original>
